<compile_context>
chip_gen: v5e
topology: v5e:2x2
jax: 0.10.0
libtpu: 0.0.40
codegen_flags: <defaults>
</compile_context>

<pallas_src>
import jax
import jax.numpy as jnp
from jax.experimental import pallas as pl
from jax.experimental.pallas import tpu as pltpu


ROWS_PER_STEP = 128  # tokens gathered per grid step


def _round_up(n, m):
    return ((n + m - 1) // m) * m


def _make_gather_kernel(rows_per_step, vocab_size):
    def kernel(ids_ref, e_hbm, out_ref, sem):
        # ids_ref : (Np,) int32 in SMEM (scalar prefetch)
        # e_hbm   : (V, D) embedding table, left in HBM (memory_space=pl.ANY)
        # out_ref : (T, D) output tile in VMEM (auto-pipelined writeback)
        # sem     : single DMA-completion semaphore shared by all T copies
        base = pl.program_id(0) * rows_per_step
        copies = []
        for j in range(rows_per_step):
            row = ids_ref[base + j]
            # Clamp on the scalar path: keeps a bad index from driving an
            # out-of-bounds HBM DMA (torch.nn.Embedding would raise).
            row = jnp.minimum(jnp.maximum(row, 0), vocab_size - 1)
            cp = pltpu.make_async_copy(
                e_hbm.at[pl.ds(row, 1), :],    # one table row in HBM
                out_ref.at[pl.ds(j, 1), :],    # directly into the output tile
                sem,
            )
            cp.start()
            copies.append(cp)
        # All T row DMAs are now in flight; retire them (each wait accounts
        # for one (1, D) row completion on the shared semaphore).
        for cp in copies:
            cp.wait()

    return kernel


def embedding_forward(x, E, *, rows_per_step=ROWS_PER_STEP):
    """x: integer array (any shape); E: (V, D). Returns E[x], shape x.shape + (D,)."""
    orig_shape = x.shape
    V, D = E.shape
    ids = x.reshape(-1).astype(jnp.int32)
    N = ids.shape[0]

    if N == 0:
        return jnp.zeros((*orig_shape, D), dtype=E.dtype)

    # Rows per grid step: multiple of the dtype sublane pack, clamped for
    # small inputs so we don't build a mostly-padded tile.
    pack = max(8, 32 // E.dtype.itemsize)
    T = min(_round_up(rows_per_step, pack), _round_up(N, pack))
    T = max(T, pack)

    # Pad the (cheap, int32) id vector so the grid is exact.  Pad ids are 0
    # (in range); their gathered rows land in the padded output tail, which is
    # dropped below.  When N % T == 0 (typical production token counts) there
    # is no padding and no extra output copy.
    pad = (-N) % T
    if pad:
        ids = jnp.pad(ids, (0, pad))
    Np = N + pad

    # VMEM budget: output tile double buffer (~2*T*D*itemsize) + slack.
    d_lanes = _round_up(D, 128)
    needed = 4 * T * d_lanes * E.dtype.itemsize + (1 << 20)
    vmem_limit = int(min(max(needed, 32 << 20), 128 << 20))

    out = pl.pallas_call(
        _make_gather_kernel(T, V),
        out_shape=jax.ShapeDtypeStruct((Np, D), E.dtype),
        grid_spec=pltpu.PrefetchScalarGridSpec(
            num_scalar_prefetch=1,
            grid=(Np // T,),
            in_specs=[pl.BlockSpec(memory_space=pl.ANY)],   # table stays in HBM
            out_specs=pl.BlockSpec((T, D), lambda i, ids_ref: (i, 0)),
            scratch_shapes=[pltpu.SemaphoreType.DMA(())],
        ),
        compiler_params=pltpu.CompilerParams(
            dimension_semantics=("parallel",),  # megacore/v7x: split the row grid
            vmem_limit_bytes=vmem_limit,
        ),
    )(ids, E)

    if pad:
        out = out[:N]
    return out.reshape(*orig_shape, D)


if __name__ == "__main__":
    key = jax.random.PRNGKey(0)
    k_e, k_x = jax.random.split(key)

    num_embeddings = 32   # vocab size V
    embedding_dim = 32    # D (production D is usually a multiple of 128)
    batch, seq = 2, 8

    # deterministic "torch.randn"-style table
    E = jax.random.normal(k_e, (num_embeddings, embedding_dim), dtype=jnp.float32)
    # deterministic in-range integer indices
    x = jax.random.randint(k_x, (batch, seq), 0, num_embeddings, dtype=jnp.int32)

    out = embedding_forward(x, E)
    out = jax.block_until_ready(out)

    # reference check against plain JAX gather (same semantics as torch self.E[x])
    ref = E[x]
    assert out.shape == (batch, seq, embedding_dim)
    assert jnp.allclose(out, ref, atol=0.0), "mismatch vs reference gather"

    print("KERNEL_OK")
</pallas_src>

<mosaic_0001>
module attributes {stable_mosaic.version = 11 : i64} {
  func.func @kernel(%arg0: i32, %arg1: memref<16xi32, #tpu.memory_space<smem>>, %arg2: memref<32x32xf32, #tpu.memory_space<any>>, %arg3: memref<16x32xf32, #tpu.memory_space<vmem>>, %arg4: memref<!tpu.dma_semaphore, #tpu.memory_space<semaphore_mem>>) attributes {dimension_semantics = [#tpu.dimension_semantics<parallel>], iteration_bounds = array<i64: 1>, scalar_prefetch = 1 : i64, scratch_operands = 1 : i64, tpu.core_type = #tpu.core_type<tc>, window_params = [{}, {transform_indices = @transform_1, window_bounds = array<i64: 16, 32>}]} {
    %c16_i32 = arith.constant 16 : i32
    %0 = arith.muli %arg0, %c16_i32 : i32
    %c0_i32 = arith.constant 0 : i32
    %1 = arith.addi %0, %c0_i32 : i32
    %2 = arith.index_cast %1 : i32 to index
    %3 = memref.load %arg1[%2] : memref<16xi32, #tpu.memory_space<smem>>
    %c0_i32_0 = arith.constant 0 : i32
    %4 = arith.maxsi %3, %c0_i32_0 : i32
    %c31_i32 = arith.constant 31 : i32
    %5 = arith.minsi %4, %c31_i32 : i32
    %c0_i32_1 = arith.constant 0 : i32
    %6 = tpu.memref_slice %arg2[%5, %c0_i32_1] : memref<32x32xf32, #tpu.memory_space<any>> -> memref<1x32xf32, #tpu.memory_space<any>>
    %c0_i32_2 = arith.constant 0 : i32
    %c0_i32_3 = arith.constant 0 : i32
    %7 = tpu.memref_slice %arg3[%c0_i32_2, %c0_i32_3] : memref<16x32xf32, #tpu.memory_space<vmem>> -> memref<1x32xf32, #tpu.memory_space<vmem>>
    tpu.enqueue_dma source(%6 : memref<1x32xf32, #tpu.memory_space<any>>) target(%7 : memref<1x32xf32, #tpu.memory_space<vmem>>) target_semaphore(%arg4 : memref<!tpu.dma_semaphore, #tpu.memory_space<semaphore_mem>>)
    %c1_i32 = arith.constant 1 : i32
    %8 = arith.addi %0, %c1_i32 : i32
    %9 = arith.index_cast %8 : i32 to index
    %10 = memref.load %arg1[%9] : memref<16xi32, #tpu.memory_space<smem>>
    %c0_i32_4 = arith.constant 0 : i32
    %11 = arith.maxsi %10, %c0_i32_4 : i32
    %c31_i32_5 = arith.constant 31 : i32
    %12 = arith.minsi %11, %c31_i32_5 : i32
    %c0_i32_6 = arith.constant 0 : i32
    %13 = tpu.memref_slice %arg2[%12, %c0_i32_6] : memref<32x32xf32, #tpu.memory_space<any>> -> memref<1x32xf32, #tpu.memory_space<any>>
    %c1_i32_7 = arith.constant 1 : i32
    %c0_i32_8 = arith.constant 0 : i32
    %14 = tpu.memref_slice %arg3[%c1_i32_7, %c0_i32_8] : memref<16x32xf32, #tpu.memory_space<vmem>> -> memref<1x32xf32, #tpu.memory_space<vmem>>
    tpu.enqueue_dma source(%13 : memref<1x32xf32, #tpu.memory_space<any>>) target(%14 : memref<1x32xf32, #tpu.memory_space<vmem>>) target_semaphore(%arg4 : memref<!tpu.dma_semaphore, #tpu.memory_space<semaphore_mem>>)
    %c2_i32 = arith.constant 2 : i32
    %15 = arith.addi %0, %c2_i32 : i32
    %16 = arith.index_cast %15 : i32 to index
    %17 = memref.load %arg1[%16] : memref<16xi32, #tpu.memory_space<smem>>
    %c0_i32_9 = arith.constant 0 : i32
    %18 = arith.maxsi %17, %c0_i32_9 : i32
    %c31_i32_10 = arith.constant 31 : i32
    %19 = arith.minsi %18, %c31_i32_10 : i32
    %c0_i32_11 = arith.constant 0 : i32
    %20 = tpu.memref_slice %arg2[%19, %c0_i32_11] : memref<32x32xf32, #tpu.memory_space<any>> -> memref<1x32xf32, #tpu.memory_space<any>>
    %c2_i32_12 = arith.constant 2 : i32
    %c0_i32_13 = arith.constant 0 : i32
    %21 = tpu.memref_slice %arg3[%c2_i32_12, %c0_i32_13] : memref<16x32xf32, #tpu.memory_space<vmem>> -> memref<1x32xf32, #tpu.memory_space<vmem>>
    tpu.enqueue_dma source(%20 : memref<1x32xf32, #tpu.memory_space<any>>) target(%21 : memref<1x32xf32, #tpu.memory_space<vmem>>) target_semaphore(%arg4 : memref<!tpu.dma_semaphore, #tpu.memory_space<semaphore_mem>>)
    %c3_i32 = arith.constant 3 : i32
    %22 = arith.addi %0, %c3_i32 : i32
    %23 = arith.index_cast %22 : i32 to index
    %24 = memref.load %arg1[%23] : memref<16xi32, #tpu.memory_space<smem>>
    %c0_i32_14 = arith.constant 0 : i32
    %25 = arith.maxsi %24, %c0_i32_14 : i32
    %c31_i32_15 = arith.constant 31 : i32
    %26 = arith.minsi %25, %c31_i32_15 : i32
    %c0_i32_16 = arith.constant 0 : i32
    %27 = tpu.memref_slice %arg2[%26, %c0_i32_16] : memref<32x32xf32, #tpu.memory_space<any>> -> memref<1x32xf32, #tpu.memory_space<any>>
    %c3_i32_17 = arith.constant 3 : i32
    %c0_i32_18 = arith.constant 0 : i32
    %28 = tpu.memref_slice %arg3[%c3_i32_17, %c0_i32_18] : memref<16x32xf32, #tpu.memory_space<vmem>> -> memref<1x32xf32, #tpu.memory_space<vmem>>
    tpu.enqueue_dma source(%27 : memref<1x32xf32, #tpu.memory_space<any>>) target(%28 : memref<1x32xf32, #tpu.memory_space<vmem>>) target_semaphore(%arg4 : memref<!tpu.dma_semaphore, #tpu.memory_space<semaphore_mem>>)
    %c4_i32 = arith.constant 4 : i32
    %29 = arith.addi %0, %c4_i32 : i32
    %30 = arith.index_cast %29 : i32 to index
    %31 = memref.load %arg1[%30] : memref<16xi32, #tpu.memory_space<smem>>
    %c0_i32_19 = arith.constant 0 : i32
    %32 = arith.maxsi %31, %c0_i32_19 : i32
    %c31_i32_20 = arith.constant 31 : i32
    %33 = arith.minsi %32, %c31_i32_20 : i32
    %c0_i32_21 = arith.constant 0 : i32
    %34 = tpu.memref_slice %arg2[%33, %c0_i32_21] : memref<32x32xf32, #tpu.memory_space<any>> -> memref<1x32xf32, #tpu.memory_space<any>>
    %c4_i32_22 = arith.constant 4 : i32
    %c0_i32_23 = arith.constant 0 : i32
    %35 = tpu.memref_slice %arg3[%c4_i32_22, %c0_i32_23] : memref<16x32xf32, #tpu.memory_space<vmem>> -> memref<1x32xf32, #tpu.memory_space<vmem>>
    tpu.enqueue_dma source(%34 : memref<1x32xf32, #tpu.memory_space<any>>) target(%35 : memref<1x32xf32, #tpu.memory_space<vmem>>) target_semaphore(%arg4 : memref<!tpu.dma_semaphore, #tpu.memory_space<semaphore_mem>>)
    %c5_i32 = arith.constant 5 : i32
    %36 = arith.addi %0, %c5_i32 : i32
    %37 = arith.index_cast %36 : i32 to index
    %38 = memref.load %arg1[%37] : memref<16xi32, #tpu.memory_space<smem>>
    %c0_i32_24 = arith.constant 0 : i32
    %39 = arith.maxsi %38, %c0_i32_24 : i32
    %c31_i32_25 = arith.constant 31 : i32
    %40 = arith.minsi %39, %c31_i32_25 : i32
    %c0_i32_26 = arith.constant 0 : i32
    %41 = tpu.memref_slice %arg2[%40, %c0_i32_26] : memref<32x32xf32, #tpu.memory_space<any>> -> memref<1x32xf32, #tpu.memory_space<any>>
    %c5_i32_27 = arith.constant 5 : i32
    %c0_i32_28 = arith.constant 0 : i32
    %42 = tpu.memref_slice %arg3[%c5_i32_27, %c0_i32_28] : memref<16x32xf32, #tpu.memory_space<vmem>> -> memref<1x32xf32, #tpu.memory_space<vmem>>
    tpu.enqueue_dma source(%41 : memref<1x32xf32, #tpu.memory_space<any>>) target(%42 : memref<1x32xf32, #tpu.memory_space<vmem>>) target_semaphore(%arg4 : memref<!tpu.dma_semaphore, #tpu.memory_space<semaphore_mem>>)
    %c6_i32 = arith.constant 6 : i32
    %43 = arith.addi %0, %c6_i32 : i32
    %44 = arith.index_cast %43 : i32 to index
    %45 = memref.load %arg1[%44] : memref<16xi32, #tpu.memory_space<smem>>
    %c0_i32_29 = arith.constant 0 : i32
    %46 = arith.maxsi %45, %c0_i32_29 : i32
    %c31_i32_30 = arith.constant 31 : i32
    %47 = arith.minsi %46, %c31_i32_30 : i32
    %c0_i32_31 = arith.constant 0 : i32
    %48 = tpu.memref_slice %arg2[%47, %c0_i32_31] : memref<32x32xf32, #tpu.memory_space<any>> -> memref<1x32xf32, #tpu.memory_space<any>>
    %c6_i32_32 = arith.constant 6 : i32
    %c0_i32_33 = arith.constant 0 : i32
    %49 = tpu.memref_slice %arg3[%c6_i32_32, %c0_i32_33] : memref<16x32xf32, #tpu.memory_space<vmem>> -> memref<1x32xf32, #tpu.memory_space<vmem>>
    tpu.enqueue_dma source(%48 : memref<1x32xf32, #tpu.memory_space<any>>) target(%49 : memref<1x32xf32, #tpu.memory_space<vmem>>) target_semaphore(%arg4 : memref<!tpu.dma_semaphore, #tpu.memory_space<semaphore_mem>>)
    %c7_i32 = arith.constant 7 : i32
    %50 = arith.addi %0, %c7_i32 : i32
    %51 = arith.index_cast %50 : i32 to index
    %52 = memref.load %arg1[%51] : memref<16xi32, #tpu.memory_space<smem>>
    %c0_i32_34 = arith.constant 0 : i32
    %53 = arith.maxsi %52, %c0_i32_34 : i32
    %c31_i32_35 = arith.constant 31 : i32
    %54 = arith.minsi %53, %c31_i32_35 : i32
    %c0_i32_36 = arith.constant 0 : i32
    %55 = tpu.memref_slice %arg2[%54, %c0_i32_36] : memref<32x32xf32, #tpu.memory_space<any>> -> memref<1x32xf32, #tpu.memory_space<any>>
    %c7_i32_37 = arith.constant 7 : i32
    %c0_i32_38 = arith.constant 0 : i32
    %56 = tpu.memref_slice %arg3[%c7_i32_37, %c0_i32_38] : memref<16x32xf32, #tpu.memory_space<vmem>> -> memref<1x32xf32, #tpu.memory_space<vmem>>
    tpu.enqueue_dma source(%55 : memref<1x32xf32, #tpu.memory_space<any>>) target(%56 : memref<1x32xf32, #tpu.memory_space<vmem>>) target_semaphore(%arg4 : memref<!tpu.dma_semaphore, #tpu.memory_space<semaphore_mem>>)
    %c8_i32 = arith.constant 8 : i32
    %57 = arith.addi %0, %c8_i32 : i32
    %58 = arith.index_cast %57 : i32 to index
    %59 = memref.load %arg1[%58] : memref<16xi32, #tpu.memory_space<smem>>
    %c0_i32_39 = arith.constant 0 : i32
    %60 = arith.maxsi %59, %c0_i32_39 : i32
    %c31_i32_40 = arith.constant 31 : i32
    %61 = arith.minsi %60, %c31_i32_40 : i32
    %c0_i32_41 = arith.constant 0 : i32
    %62 = tpu.memref_slice %arg2[%61, %c0_i32_41] : memref<32x32xf32, #tpu.memory_space<any>> -> memref<1x32xf32, #tpu.memory_space<any>>
    %c8_i32_42 = arith.constant 8 : i32
    %c0_i32_43 = arith.constant 0 : i32
    %63 = tpu.memref_slice %arg3[%c8_i32_42, %c0_i32_43] : memref<16x32xf32, #tpu.memory_space<vmem>> -> memref<1x32xf32, #tpu.memory_space<vmem>>
    tpu.enqueue_dma source(%62 : memref<1x32xf32, #tpu.memory_space<any>>) target(%63 : memref<1x32xf32, #tpu.memory_space<vmem>>) target_semaphore(%arg4 : memref<!tpu.dma_semaphore, #tpu.memory_space<semaphore_mem>>)
    %c9_i32 = arith.constant 9 : i32
    %64 = arith.addi %0, %c9_i32 : i32
    %65 = arith.index_cast %64 : i32 to index
    %66 = memref.load %arg1[%65] : memref<16xi32, #tpu.memory_space<smem>>
    %c0_i32_44 = arith.constant 0 : i32
    %67 = arith.maxsi %66, %c0_i32_44 : i32
    %c31_i32_45 = arith.constant 31 : i32
    %68 = arith.minsi %67, %c31_i32_45 : i32
    %c0_i32_46 = arith.constant 0 : i32
    %69 = tpu.memref_slice %arg2[%68, %c0_i32_46] : memref<32x32xf32, #tpu.memory_space<any>> -> memref<1x32xf32, #tpu.memory_space<any>>
    %c9_i32_47 = arith.constant 9 : i32
    %c0_i32_48 = arith.constant 0 : i32
    %70 = tpu.memref_slice %arg3[%c9_i32_47, %c0_i32_48] : memref<16x32xf32, #tpu.memory_space<vmem>> -> memref<1x32xf32, #tpu.memory_space<vmem>>
    tpu.enqueue_dma source(%69 : memref<1x32xf32, #tpu.memory_space<any>>) target(%70 : memref<1x32xf32, #tpu.memory_space<vmem>>) target_semaphore(%arg4 : memref<!tpu.dma_semaphore, #tpu.memory_space<semaphore_mem>>)
    %c10_i32 = arith.constant 10 : i32
    %71 = arith.addi %0, %c10_i32 : i32
    %72 = arith.index_cast %71 : i32 to index
    %73 = memref.load %arg1[%72] : memref<16xi32, #tpu.memory_space<smem>>
    %c0_i32_49 = arith.constant 0 : i32
    %74 = arith.maxsi %73, %c0_i32_49 : i32
    %c31_i32_50 = arith.constant 31 : i32
    %75 = arith.minsi %74, %c31_i32_50 : i32
    %c0_i32_51 = arith.constant 0 : i32
    %76 = tpu.memref_slice %arg2[%75, %c0_i32_51] : memref<32x32xf32, #tpu.memory_space<any>> -> memref<1x32xf32, #tpu.memory_space<any>>
    %c10_i32_52 = arith.constant 10 : i32
    %c0_i32_53 = arith.constant 0 : i32
    %77 = tpu.memref_slice %arg3[%c10_i32_52, %c0_i32_53] : memref<16x32xf32, #tpu.memory_space<vmem>> -> memref<1x32xf32, #tpu.memory_space<vmem>>
    tpu.enqueue_dma source(%76 : memref<1x32xf32, #tpu.memory_space<any>>) target(%77 : memref<1x32xf32, #tpu.memory_space<vmem>>) target_semaphore(%arg4 : memref<!tpu.dma_semaphore, #tpu.memory_space<semaphore_mem>>)
    %c11_i32 = arith.constant 11 : i32
    %78 = arith.addi %0, %c11_i32 : i32
    %79 = arith.index_cast %78 : i32 to index
    %80 = memref.load %arg1[%79] : memref<16xi32, #tpu.memory_space<smem>>
    %c0_i32_54 = arith.constant 0 : i32
    %81 = arith.maxsi %80, %c0_i32_54 : i32
    %c31_i32_55 = arith.constant 31 : i32
    %82 = arith.minsi %81, %c31_i32_55 : i32
    %c0_i32_56 = arith.constant 0 : i32
    %83 = tpu.memref_slice %arg2[%82, %c0_i32_56] : memref<32x32xf32, #tpu.memory_space<any>> -> memref<1x32xf32, #tpu.memory_space<any>>
    %c11_i32_57 = arith.constant 11 : i32
    %c0_i32_58 = arith.constant 0 : i32
    %84 = tpu.memref_slice %arg3[%c11_i32_57, %c0_i32_58] : memref<16x32xf32, #tpu.memory_space<vmem>> -> memref<1x32xf32, #tpu.memory_space<vmem>>
    tpu.enqueue_dma source(%83 : memref<1x32xf32, #tpu.memory_space<any>>) target(%84 : memref<1x32xf32, #tpu.memory_space<vmem>>) target_semaphore(%arg4 : memref<!tpu.dma_semaphore, #tpu.memory_space<semaphore_mem>>)
    %c12_i32 = arith.constant 12 : i32
    %85 = arith.addi %0, %c12_i32 : i32
    %86 = arith.index_cast %85 : i32 to index
    %87 = memref.load %arg1[%86] : memref<16xi32, #tpu.memory_space<smem>>
    %c0_i32_59 = arith.constant 0 : i32
    %88 = arith.maxsi %87, %c0_i32_59 : i32
    %c31_i32_60 = arith.constant 31 : i32
    %89 = arith.minsi %88, %c31_i32_60 : i32
    %c0_i32_61 = arith.constant 0 : i32
    %90 = tpu.memref_slice %arg2[%89, %c0_i32_61] : memref<32x32xf32, #tpu.memory_space<any>> -> memref<1x32xf32, #tpu.memory_space<any>>
    %c12_i32_62 = arith.constant 12 : i32
    %c0_i32_63 = arith.constant 0 : i32
    %91 = tpu.memref_slice %arg3[%c12_i32_62, %c0_i32_63] : memref<16x32xf32, #tpu.memory_space<vmem>> -> memref<1x32xf32, #tpu.memory_space<vmem>>
    tpu.enqueue_dma source(%90 : memref<1x32xf32, #tpu.memory_space<any>>) target(%91 : memref<1x32xf32, #tpu.memory_space<vmem>>) target_semaphore(%arg4 : memref<!tpu.dma_semaphore, #tpu.memory_space<semaphore_mem>>)
    %c13_i32 = arith.constant 13 : i32
    %92 = arith.addi %0, %c13_i32 : i32
    %93 = arith.index_cast %92 : i32 to index
    %94 = memref.load %arg1[%93] : memref<16xi32, #tpu.memory_space<smem>>
    %c0_i32_64 = arith.constant 0 : i32
    %95 = arith.maxsi %94, %c0_i32_64 : i32
    %c31_i32_65 = arith.constant 31 : i32
    %96 = arith.minsi %95, %c31_i32_65 : i32
    %c0_i32_66 = arith.constant 0 : i32
    %97 = tpu.memref_slice %arg2[%96, %c0_i32_66] : memref<32x32xf32, #tpu.memory_space<any>> -> memref<1x32xf32, #tpu.memory_space<any>>
    %c13_i32_67 = arith.constant 13 : i32
    %c0_i32_68 = arith.constant 0 : i32
    %98 = tpu.memref_slice %arg3[%c13_i32_67, %c0_i32_68] : memref<16x32xf32, #tpu.memory_space<vmem>> -> memref<1x32xf32, #tpu.memory_space<vmem>>
    tpu.enqueue_dma source(%97 : memref<1x32xf32, #tpu.memory_space<any>>) target(%98 : memref<1x32xf32, #tpu.memory_space<vmem>>) target_semaphore(%arg4 : memref<!tpu.dma_semaphore, #tpu.memory_space<semaphore_mem>>)
    %c14_i32 = arith.constant 14 : i32
    %99 = arith.addi %0, %c14_i32 : i32
    %100 = arith.index_cast %99 : i32 to index
    %101 = memref.load %arg1[%100] : memref<16xi32, #tpu.memory_space<smem>>
    %c0_i32_69 = arith.constant 0 : i32
    %102 = arith.maxsi %101, %c0_i32_69 : i32
    %c31_i32_70 = arith.constant 31 : i32
    %103 = arith.minsi %102, %c31_i32_70 : i32
    %c0_i32_71 = arith.constant 0 : i32
    %104 = tpu.memref_slice %arg2[%103, %c0_i32_71] : memref<32x32xf32, #tpu.memory_space<any>> -> memref<1x32xf32, #tpu.memory_space<any>>
    %c14_i32_72 = arith.constant 14 : i32
    %c0_i32_73 = arith.constant 0 : i32
    %105 = tpu.memref_slice %arg3[%c14_i32_72, %c0_i32_73] : memref<16x32xf32, #tpu.memory_space<vmem>> -> memref<1x32xf32, #tpu.memory_space<vmem>>
    tpu.enqueue_dma source(%104 : memref<1x32xf32, #tpu.memory_space<any>>) target(%105 : memref<1x32xf32, #tpu.memory_space<vmem>>) target_semaphore(%arg4 : memref<!tpu.dma_semaphore, #tpu.memory_space<semaphore_mem>>)
    %c15_i32 = arith.constant 15 : i32
    %106 = arith.addi %0, %c15_i32 : i32
    %107 = arith.index_cast %106 : i32 to index
    %108 = memref.load %arg1[%107] : memref<16xi32, #tpu.memory_space<smem>>
    %c0_i32_74 = arith.constant 0 : i32
    %109 = arith.maxsi %108, %c0_i32_74 : i32
    %c31_i32_75 = arith.constant 31 : i32
    %110 = arith.minsi %109, %c31_i32_75 : i32
    %c0_i32_76 = arith.constant 0 : i32
    %111 = tpu.memref_slice %arg2[%110, %c0_i32_76] : memref<32x32xf32, #tpu.memory_space<any>> -> memref<1x32xf32, #tpu.memory_space<any>>
    %c15_i32_77 = arith.constant 15 : i32
    %c0_i32_78 = arith.constant 0 : i32
    %112 = tpu.memref_slice %arg3[%c15_i32_77, %c0_i32_78] : memref<16x32xf32, #tpu.memory_space<vmem>> -> memref<1x32xf32, #tpu.memory_space<vmem>>
    tpu.enqueue_dma source(%111 : memref<1x32xf32, #tpu.memory_space<any>>) target(%112 : memref<1x32xf32, #tpu.memory_space<vmem>>) target_semaphore(%arg4 : memref<!tpu.dma_semaphore, #tpu.memory_space<semaphore_mem>>)
    %c0_i32_79 = arith.constant 0 : i32
    %113 = tpu.memref_slice %arg2[%5, %c0_i32_79] : memref<32x32xf32, #tpu.memory_space<any>> -> memref<1x32xf32, #tpu.memory_space<any>>
    %c0_i32_80 = arith.constant 0 : i32
    %c0_i32_81 = arith.constant 0 : i32
    %114 = tpu.memref_slice %arg3[%c0_i32_80, %c0_i32_81] : memref<16x32xf32, #tpu.memory_space<vmem>> -> memref<1x32xf32, #tpu.memory_space<vmem>>
    tpu.wait_dma2 semaphore(%arg4 : memref<!tpu.dma_semaphore, #tpu.memory_space<semaphore_mem>>) src(%113 : memref<1x32xf32, #tpu.memory_space<any>>) dst(%114 : memref<1x32xf32, #tpu.memory_space<vmem>>)
    %c0_i32_82 = arith.constant 0 : i32
    %115 = tpu.memref_slice %arg2[%12, %c0_i32_82] : memref<32x32xf32, #tpu.memory_space<any>> -> memref<1x32xf32, #tpu.memory_space<any>>
    %c1_i32_83 = arith.constant 1 : i32
    %c0_i32_84 = arith.constant 0 : i32
    %116 = tpu.memref_slice %arg3[%c1_i32_83, %c0_i32_84] : memref<16x32xf32, #tpu.memory_space<vmem>> -> memref<1x32xf32, #tpu.memory_space<vmem>>
    tpu.wait_dma2 semaphore(%arg4 : memref<!tpu.dma_semaphore, #tpu.memory_space<semaphore_mem>>) src(%115 : memref<1x32xf32, #tpu.memory_space<any>>) dst(%116 : memref<1x32xf32, #tpu.memory_space<vmem>>)
    %c0_i32_85 = arith.constant 0 : i32
    %117 = tpu.memref_slice %arg2[%19, %c0_i32_85] : memref<32x32xf32, #tpu.memory_space<any>> -> memref<1x32xf32, #tpu.memory_space<any>>
    %c2_i32_86 = arith.constant 2 : i32
    %c0_i32_87 = arith.constant 0 : i32
    %118 = tpu.memref_slice %arg3[%c2_i32_86, %c0_i32_87] : memref<16x32xf32, #tpu.memory_space<vmem>> -> memref<1x32xf32, #tpu.memory_space<vmem>>
    tpu.wait_dma2 semaphore(%arg4 : memref<!tpu.dma_semaphore, #tpu.memory_space<semaphore_mem>>) src(%117 : memref<1x32xf32, #tpu.memory_space<any>>) dst(%118 : memref<1x32xf32, #tpu.memory_space<vmem>>)
    %c0_i32_88 = arith.constant 0 : i32
    %119 = tpu.memref_slice %arg2[%26, %c0_i32_88] : memref<32x32xf32, #tpu.memory_space<any>> -> memref<1x32xf32, #tpu.memory_space<any>>
    %c3_i32_89 = arith.constant 3 : i32
    %c0_i32_90 = arith.constant 0 : i32
    %120 = tpu.memref_slice %arg3[%c3_i32_89, %c0_i32_90] : memref<16x32xf32, #tpu.memory_space<vmem>> -> memref<1x32xf32, #tpu.memory_space<vmem>>
    tpu.wait_dma2 semaphore(%arg4 : memref<!tpu.dma_semaphore, #tpu.memory_space<semaphore_mem>>) src(%119 : memref<1x32xf32, #tpu.memory_space<any>>) dst(%120 : memref<1x32xf32, #tpu.memory_space<vmem>>)
    %c0_i32_91 = arith.constant 0 : i32
    %121 = tpu.memref_slice %arg2[%33, %c0_i32_91] : memref<32x32xf32, #tpu.memory_space<any>> -> memref<1x32xf32, #tpu.memory_space<any>>
    %c4_i32_92 = arith.constant 4 : i32
    %c0_i32_93 = arith.constant 0 : i32
    %122 = tpu.memref_slice %arg3[%c4_i32_92, %c0_i32_93] : memref<16x32xf32, #tpu.memory_space<vmem>> -> memref<1x32xf32, #tpu.memory_space<vmem>>
    tpu.wait_dma2 semaphore(%arg4 : memref<!tpu.dma_semaphore, #tpu.memory_space<semaphore_mem>>) src(%121 : memref<1x32xf32, #tpu.memory_space<any>>) dst(%122 : memref<1x32xf32, #tpu.memory_space<vmem>>)
    %c0_i32_94 = arith.constant 0 : i32
    %123 = tpu.memref_slice %arg2[%40, %c0_i32_94] : memref<32x32xf32, #tpu.memory_space<any>> -> memref<1x32xf32, #tpu.memory_space<any>>
    %c5_i32_95 = arith.constant 5 : i32
    %c0_i32_96 = arith.constant 0 : i32
    %124 = tpu.memref_slice %arg3[%c5_i32_95, %c0_i32_96] : memref<16x32xf32, #tpu.memory_space<vmem>> -> memref<1x32xf32, #tpu.memory_space<vmem>>
    tpu.wait_dma2 semaphore(%arg4 : memref<!tpu.dma_semaphore, #tpu.memory_space<semaphore_mem>>) src(%123 : memref<1x32xf32, #tpu.memory_space<any>>) dst(%124 : memref<1x32xf32, #tpu.memory_space<vmem>>)
    %c0_i32_97 = arith.constant 0 : i32
    %125 = tpu.memref_slice %arg2[%47, %c0_i32_97] : memref<32x32xf32, #tpu.memory_space<any>> -> memref<1x32xf32, #tpu.memory_space<any>>
    %c6_i32_98 = arith.constant 6 : i32
    %c0_i32_99 = arith.constant 0 : i32
    %126 = tpu.memref_slice %arg3[%c6_i32_98, %c0_i32_99] : memref<16x32xf32, #tpu.memory_space<vmem>> -> memref<1x32xf32, #tpu.memory_space<vmem>>
    tpu.wait_dma2 semaphore(%arg4 : memref<!tpu.dma_semaphore, #tpu.memory_space<semaphore_mem>>) src(%125 : memref<1x32xf32, #tpu.memory_space<any>>) dst(%126 : memref<1x32xf32, #tpu.memory_space<vmem>>)
    %c0_i32_100 = arith.constant 0 : i32
    %127 = tpu.memref_slice %arg2[%54, %c0_i32_100] : memref<32x32xf32, #tpu.memory_space<any>> -> memref<1x32xf32, #tpu.memory_space<any>>
    %c7_i32_101 = arith.constant 7 : i32
    %c0_i32_102 = arith.constant 0 : i32
    %128 = tpu.memref_slice %arg3[%c7_i32_101, %c0_i32_102] : memref<16x32xf32, #tpu.memory_space<vmem>> -> memref<1x32xf32, #tpu.memory_space<vmem>>
    tpu.wait_dma2 semaphore(%arg4 : memref<!tpu.dma_semaphore, #tpu.memory_space<semaphore_mem>>) src(%127 : memref<1x32xf32, #tpu.memory_space<any>>) dst(%128 : memref<1x32xf32, #tpu.memory_space<vmem>>)
    %c0_i32_103 = arith.constant 0 : i32
    %129 = tpu.memref_slice %arg2[%61, %c0_i32_103] : memref<32x32xf32, #tpu.memory_space<any>> -> memref<1x32xf32, #tpu.memory_space<any>>
    %c8_i32_104 = arith.constant 8 : i32
    %c0_i32_105 = arith.constant 0 : i32
    %130 = tpu.memref_slice %arg3[%c8_i32_104, %c0_i32_105] : memref<16x32xf32, #tpu.memory_space<vmem>> -> memref<1x32xf32, #tpu.memory_space<vmem>>
    tpu.wait_dma2 semaphore(%arg4 : memref<!tpu.dma_semaphore, #tpu.memory_space<semaphore_mem>>) src(%129 : memref<1x32xf32, #tpu.memory_space<any>>) dst(%130 : memref<1x32xf32, #tpu.memory_space<vmem>>)
    %c0_i32_106 = arith.constant 0 : i32
    %131 = tpu.memref_slice %arg2[%68, %c0_i32_106] : memref<32x32xf32, #tpu.memory_space<any>> -> memref<1x32xf32, #tpu.memory_space<any>>
    %c9_i32_107 = arith.constant 9 : i32
    %c0_i32_108 = arith.constant 0 : i32
    %132 = tpu.memref_slice %arg3[%c9_i32_107, %c0_i32_108] : memref<16x32xf32, #tpu.memory_space<vmem>> -> memref<1x32xf32, #tpu.memory_space<vmem>>
    tpu.wait_dma2 semaphore(%arg4 : memref<!tpu.dma_semaphore, #tpu.memory_space<semaphore_mem>>) src(%131 : memref<1x32xf32, #tpu.memory_space<any>>) dst(%132 : memref<1x32xf32, #tpu.memory_space<vmem>>)
    %c0_i32_109 = arith.constant 0 : i32
    %133 = tpu.memref_slice %arg2[%75, %c0_i32_109] : memref<32x32xf32, #tpu.memory_space<any>> -> memref<1x32xf32, #tpu.memory_space<any>>
    %c10_i32_110 = arith.constant 10 : i32
    %c0_i32_111 = arith.constant 0 : i32
    %134 = tpu.memref_slice %arg3[%c10_i32_110, %c0_i32_111] : memref<16x32xf32, #tpu.memory_space<vmem>> -> memref<1x32xf32, #tpu.memory_space<vmem>>
    tpu.wait_dma2 semaphore(%arg4 : memref<!tpu.dma_semaphore, #tpu.memory_space<semaphore_mem>>) src(%133 : memref<1x32xf32, #tpu.memory_space<any>>) dst(%134 : memref<1x32xf32, #tpu.memory_space<vmem>>)
    %c0_i32_112 = arith.constant 0 : i32
    %135 = tpu.memref_slice %arg2[%82, %c0_i32_112] : memref<32x32xf32, #tpu.memory_space<any>> -> memref<1x32xf32, #tpu.memory_space<any>>
    %c11_i32_113 = arith.constant 11 : i32
    %c0_i32_114 = arith.constant 0 : i32
    %136 = tpu.memref_slice %arg3[%c11_i32_113, %c0_i32_114] : memref<16x32xf32, #tpu.memory_space<vmem>> -> memref<1x32xf32, #tpu.memory_space<vmem>>
    tpu.wait_dma2 semaphore(%arg4 : memref<!tpu.dma_semaphore, #tpu.memory_space<semaphore_mem>>) src(%135 : memref<1x32xf32, #tpu.memory_space<any>>) dst(%136 : memref<1x32xf32, #tpu.memory_space<vmem>>)
    %c0_i32_115 = arith.constant 0 : i32
    %137 = tpu.memref_slice %arg2[%89, %c0_i32_115] : memref<32x32xf32, #tpu.memory_space<any>> -> memref<1x32xf32, #tpu.memory_space<any>>
    %c12_i32_116 = arith.constant 12 : i32
    %c0_i32_117 = arith.constant 0 : i32
    %138 = tpu.memref_slice %arg3[%c12_i32_116, %c0_i32_117] : memref<16x32xf32, #tpu.memory_space<vmem>> -> memref<1x32xf32, #tpu.memory_space<vmem>>
    tpu.wait_dma2 semaphore(%arg4 : memref<!tpu.dma_semaphore, #tpu.memory_space<semaphore_mem>>) src(%137 : memref<1x32xf32, #tpu.memory_space<any>>) dst(%138 : memref<1x32xf32, #tpu.memory_space<vmem>>)
    %c0_i32_118 = arith.constant 0 : i32
    %139 = tpu.memref_slice %arg2[%96, %c0_i32_118] : memref<32x32xf32, #tpu.memory_space<any>> -> memref<1x32xf32, #tpu.memory_space<any>>
    %c13_i32_119 = arith.constant 13 : i32
    %c0_i32_120 = arith.constant 0 : i32
    %140 = tpu.memref_slice %arg3[%c13_i32_119, %c0_i32_120] : memref<16x32xf32, #tpu.memory_space<vmem>> -> memref<1x32xf32, #tpu.memory_space<vmem>>
    tpu.wait_dma2 semaphore(%arg4 : memref<!tpu.dma_semaphore, #tpu.memory_space<semaphore_mem>>) src(%139 : memref<1x32xf32, #tpu.memory_space<any>>) dst(%140 : memref<1x32xf32, #tpu.memory_space<vmem>>)
    %c0_i32_121 = arith.constant 0 : i32
    %141 = tpu.memref_slice %arg2[%103, %c0_i32_121] : memref<32x32xf32, #tpu.memory_space<any>> -> memref<1x32xf32, #tpu.memory_space<any>>
    %c14_i32_122 = arith.constant 14 : i32
    %c0_i32_123 = arith.constant 0 : i32
    %142 = tpu.memref_slice %arg3[%c14_i32_122, %c0_i32_123] : memref<16x32xf32, #tpu.memory_space<vmem>> -> memref<1x32xf32, #tpu.memory_space<vmem>>
    tpu.wait_dma2 semaphore(%arg4 : memref<!tpu.dma_semaphore, #tpu.memory_space<semaphore_mem>>) src(%141 : memref<1x32xf32, #tpu.memory_space<any>>) dst(%142 : memref<1x32xf32, #tpu.memory_space<vmem>>)
    %c0_i32_124 = arith.constant 0 : i32
    %143 = tpu.memref_slice %arg2[%110, %c0_i32_124] : memref<32x32xf32, #tpu.memory_space<any>> -> memref<1x32xf32, #tpu.memory_space<any>>
    %c15_i32_125 = arith.constant 15 : i32
    %c0_i32_126 = arith.constant 0 : i32
    %144 = tpu.memref_slice %arg3[%c15_i32_125, %c0_i32_126] : memref<16x32xf32, #tpu.memory_space<vmem>> -> memref<1x32xf32, #tpu.memory_space<vmem>>
    tpu.wait_dma2 semaphore(%arg4 : memref<!tpu.dma_semaphore, #tpu.memory_space<semaphore_mem>>) src(%143 : memref<1x32xf32, #tpu.memory_space<any>>) dst(%144 : memref<1x32xf32, #tpu.memory_space<vmem>>)
    return
  }
  func.func @transform_1(%arg0: i32, %arg1: memref<16xi32, #tpu.memory_space<smem>>) -> (i32, i32) {
    %c0_i32 = arith.constant 0 : i32
    %c0_i32_0 = arith.constant 0 : i32
    return %arg0, %c0_i32 : i32, i32
  }
}

</mosaic_0001>

<llo_original>
// kernel: tpu_custom_call.1
$region0: #{tpu_custom_call.1}
  #allocation0 [shape = 'u32[]', space=smem, size = 0x4, offset = 0x4, fixed_abs, tag = 'smem constant byte address 0x4 - core index']
  #allocation1 [shape = 'u32[72,128]{1,0:T(1,128)}', space=vmem, size = 0x9000, scoped, tag = 'internal scratch']
  #allocation2 [shape = 's32[1]{0}', space=sflag, size = 0x4, scoped, tag = 'scratch operand']
  #allocation3 [shape = 's32[1]{0}', space=sflag, size = 0x4, scoped, tag = 'scoped memory for tpu_custom_call.1']
  #allocation4 [shape = 'u8[512]{0}', space=smem, size = 0x200, scoped, tag = 'prefetched SMEM operand 0']
  #allocation7 [shape = 's32[]', space=sflag, size = 0x4, offset = 0, fixed_abs, tag = 'sflag constant byte address 0x0 - dummy sync flag']
  #allocation8 [shape = 's32[]', space=sflag, size = 0x4, offset = 0, fixed_abs, tag = 'sflag constant byte address 0x0 - dummy sync flag']
  #allocation9 [shape = 'u32[]', space=smem, size = 0x4, offset = 0x44, fixed_abs, tag = 'smem constant byte address 0x44 - assertion arg 0']
  #allocation10 [shape = 'u32[]', space=smem, size = 0x4, offset = 0x48, fixed_abs, tag = 'smem constant byte address 0x48 - assertion arg 1']
  #allocation11 [shape = 's32[]', space=sflag, size = 0x4, offset = 0, fixed_abs, tag = 'sflag constant byte address 0x0 - dummy sync flag']
  #allocation12 [shape = 's32[]', space=sflag, size = 0x4, offset = 0, fixed_abs, tag = 'sflag constant byte address 0x0 - dummy sync flag']
  #allocation13 [shape = 's32[]', space=sflag, size = 0x4, offset = 0, fixed_abs, tag = 'sflag constant byte address 0x0 - dummy sync flag']
  #allocation14 [shape = 's32[]', space=sflag, size = 0x4, offset = 0, fixed_abs, tag = 'sflag constant byte address 0x0 - dummy sync flag']
  #allocation15 [shape = 's32[]', space=sflag, size = 0x4, offset = 0, fixed_abs, tag = 'sflag constant byte address 0x0 - dummy sync flag']
  #allocation16 [shape = 's32[]', space=sflag, size = 0x4, offset = 0, fixed_abs, tag = 'sflag constant byte address 0x0 - dummy sync flag']
  #allocation17 [shape = 's32[]', space=sflag, size = 0x4, offset = 0, fixed_abs, tag = 'sflag constant byte address 0x0 - dummy sync flag']
  #allocation18 [shape = 's32[]', space=sflag, size = 0x4, offset = 0, fixed_abs, tag = 'sflag constant byte address 0x0 - dummy sync flag']
  #allocation19 [shape = 's32[]', space=sflag, size = 0x4, offset = 0, fixed_abs, tag = 'sflag constant byte address 0x0 - dummy sync flag']
  #allocation20 [shape = 's32[]', space=sflag, size = 0x4, offset = 0, fixed_abs, tag = 'sflag constant byte address 0x0 - dummy sync flag']
  #allocation21 [shape = 's32[]', space=sflag, size = 0x4, offset = 0, fixed_abs, tag = 'sflag constant byte address 0x0 - dummy sync flag']
  #allocation22 [shape = 's32[]', space=sflag, size = 0x4, offset = 0, fixed_abs, tag = 'sflag constant byte address 0x0 - dummy sync flag']
  #allocation23 [shape = 's32[]', space=sflag, size = 0x4, offset = 0, fixed_abs, tag = 'sflag constant byte address 0x0 - dummy sync flag']
  #allocation24 [shape = 's32[]', space=sflag, size = 0x4, offset = 0, fixed_abs, tag = 'sflag constant byte address 0x0 - dummy sync flag']
  #allocation25 [shape = 's32[]', space=sflag, size = 0x4, offset = 0, fixed_abs, tag = 'sflag constant byte address 0x0 - dummy sync flag']
  #allocation26 [shape = 's32[]', space=sflag, size = 0x4, offset = 0, fixed_abs, tag = 'sflag constant byte address 0x0 - dummy sync flag']
  #allocation27 [shape = 's32[]', space=sflag, size = 0x4, offset = 0, fixed_abs, tag = 'sflag constant byte address 0x0 - dummy sync flag']
  #allocation28 [shape = 's32[]', space=sflag, size = 0x4, offset = 0, fixed_abs, tag = 'sflag constant byte address 0x0 - dummy sync flag']
  #allocation29 [shape = 's32[]', space=sflag, size = 0x4, offset = 0, fixed_abs, tag = 'sflag constant byte address 0x0 - dummy sync flag']
  #allocation30 [shape = 's32[]', space=sflag, size = 0x4, offset = 0, fixed_abs, tag = 'sflag constant byte address 0x0 - dummy sync flag']
  #allocation31 [shape = 's32[]', space=sflag, size = 0x4, offset = 0, fixed_abs, tag = 'sflag constant byte address 0x0 - dummy sync flag']
  #allocation32 [shape = 's32[]', space=sflag, size = 0x4, offset = 0, fixed_abs, tag = 'sflag constant byte address 0x0 - dummy sync flag']
  #allocation33 [shape = 's32[]', space=sflag, size = 0x4, offset = 0, fixed_abs, tag = 'sflag constant byte address 0x0 - dummy sync flag']
  #allocation34 [shape = 's32[]', space=sflag, size = 0x4, offset = 0, fixed_abs, tag = 'sflag constant byte address 0x0 - dummy sync flag']
  #allocation35 [shape = 's32[]', space=sflag, size = 0x4, offset = 0, fixed_abs, tag = 'sflag constant byte address 0x0 - dummy sync flag']
  #allocation36 [shape = 's32[]', space=sflag, size = 0x4, offset = 0, fixed_abs, tag = 'sflag constant byte address 0x0 - dummy sync flag']
  #allocation37 [shape = 's32[]', space=sflag, size = 0x4, offset = 0, fixed_abs, tag = 'sflag constant byte address 0x0 - dummy sync flag']
  #allocation38 [shape = 's32[]', space=sflag, size = 0x4, offset = 0, fixed_abs, tag = 'sflag constant byte address 0x0 - dummy sync flag']
  #allocation39 [shape = 's32[]', space=sflag, size = 0x4, offset = 0, fixed_abs, tag = 'sflag constant byte address 0x0 - dummy sync flag']
  #allocation40 [shape = 's32[]', space=sflag, size = 0x4, offset = 0, fixed_abs, tag = 'sflag constant byte address 0x0 - dummy sync flag']
  %s0 = inlined_call_operand.hbm [shape: s32[16], index: 0, kind: input, shape index: {}]
  %s1 = inlined_call_operand.hbm [shape: f32[32,32], index: 1, kind: input, shape index: {}]
  %s2 = inlined_call_operand.hbm [shape: f32[16,32], index: 2, kind: output, shape index: {}]
  %s3 = sld [smem:[#allocation0]]
  $region74: #{tpu_custom_call.1} parent=0
    _
  %s5 = ssub.s32 1, %s3
  %s6 = scalar_select 0, %s5, %s3
  %s8 = sshll.u32 %s0, 4
  %s9 = int_to_ptr.hbm [resolvable:$true] %s8
  %11 = dma.hbm_to_smem %s9, 16, [#allocation4], [#allocation3]
  %13 = dma.done [#allocation3], 16
  %14 = sfence
  $region1: #{tpu_custom_call.1} parent=0
    #allocation5 [shape = 'u8[8192]{0}', space=vmem, size = 0x2000, scoped, tag = 'output window, operand 0, single buffered']
    #allocation6 [shape = 's32[1]{0}', space=sflag, size = 0x4, scoped, tag = 'scoped memory for tpu_custom_call.1']
    %15 = vsyncpa [#allocation6], 0
    %s16 = smul.u32 0, 16
    %s17 = sld [smem:[#allocation4 + %s16]]
    %p18 = scmp.gt.s32.totalorder %s17, 0
    %s19 = scalar_select %p18, %s17, 0
    %p20 = scmp.lt.s32.totalorder %s19, 31
    %s21 = scalar_select %p20, %s19, 31
    %s22 = scalar_lea.hbm %s1, %s21
    // Predicated region
    $region2: #{tpu_custom_call.1} parent=1 // pred_check
      _
    $region3: #{tpu_custom_call.1} parent=1 // pred_check_branch
      %24 = sbr.rel target = $region5
    $region4: #{tpu_custom_call.1} parent=1 // pred_region
      %25 = sst [smem:[#allocation9]] [#allocation8]
      %26 = sst [smem:[#allocation10]] [#allocation7]
    $region5: #{tpu_custom_call.1} parent=1 // pred_fallthru
      _
    %28 = shalt.err (0)
    %s30 = sshll.u32 %s22, 4
    %s31 = int_to_ptr.hbm [resolvable:$true] %s30
    %s32 = sshll.u32 [#allocation5], 4
    %s33 = int_to_ptr.vmem [resolvable:$true] %s32
    %35 = dma.hbm_to_vmem [thread:$0]  %s31, 16, %s33, [#allocation2]
    %s36 = sadd.s32 %s16, 1
    %s37 = sld [smem:[#allocation4 + %s36]]
    %p38 = scmp.gt.s32.totalorder %s37, 0
    %s39 = scalar_select %p38, %s37, 0
    %p40 = scmp.lt.s32.totalorder %s39, 31
    %s41 = scalar_select %p40, %s39, 31
    %s42 = scalar_lea.hbm %s1, %s41
    %s43 = scalar_lea.vmem [#allocation5], 1
    // Predicated region
    $region6: #{tpu_custom_call.1} parent=1 // pred_check
      _
    $region7: #{tpu_custom_call.1} parent=1 // pred_check_branch
      %45 = sbr.rel target = $region9
    $region8: #{tpu_custom_call.1} parent=1 // pred_region
      %46 = sst [smem:[#allocation9]] [#allocation12]
      %47 = sst [smem:[#allocation10]] [#allocation11]
    $region9: #{tpu_custom_call.1} parent=1 // pred_fallthru
      _
    %49 = shalt.err (0)
    %s51 = sshll.u32 %s42, 4
    %s52 = int_to_ptr.hbm [resolvable:$true] %s51
    %s53 = sshll.u32 %s43, 4
    %s54 = int_to_ptr.vmem [resolvable:$true] %s53
    %56 = dma.hbm_to_vmem [thread:$0]  %s52, 16, %s54, [#allocation2]
    %s57 = sadd.s32 %s16, 2
    %s58 = sld [smem:[#allocation4 + %s57]]
    %p59 = scmp.gt.s32.totalorder %s58, 0
    %s60 = scalar_select %p59, %s58, 0
    %p61 = scmp.lt.s32.totalorder %s60, 31
    %s62 = scalar_select %p61, %s60, 31
    %s63 = scalar_lea.hbm %s1, %s62
    %s64 = scalar_lea.vmem [#allocation5], 2
    // Predicated region
    $region10: #{tpu_custom_call.1} parent=1 // pred_check
      _
    $region11: #{tpu_custom_call.1} parent=1 // pred_check_branch
      %66 = sbr.rel target = $region13
    $region12: #{tpu_custom_call.1} parent=1 // pred_region
      %67 = sst [smem:[#allocation9]] [#allocation14]
      %68 = sst [smem:[#allocation10]] [#allocation13]
    $region13: #{tpu_custom_call.1} parent=1 // pred_fallthru
      _
    %70 = shalt.err (0)
    %s72 = sshll.u32 %s63, 4
    %s73 = int_to_ptr.hbm [resolvable:$true] %s72
    %s74 = sshll.u32 %s64, 4
    %s75 = int_to_ptr.vmem [resolvable:$true] %s74
    %77 = dma.hbm_to_vmem [thread:$0]  %s73, 16, %s75, [#allocation2]
    %s78 = sadd.s32 %s16, 3
    %s79 = sld [smem:[#allocation4 + %s78]]
    %p80 = scmp.gt.s32.totalorder %s79, 0
    %s81 = scalar_select %p80, %s79, 0
    %p82 = scmp.lt.s32.totalorder %s81, 31
    %s83 = scalar_select %p82, %s81, 31
    %s84 = scalar_lea.hbm %s1, %s83
    %s85 = scalar_lea.vmem [#allocation5], 3
    // Predicated region
    $region14: #{tpu_custom_call.1} parent=1 // pred_check
      _
    $region15: #{tpu_custom_call.1} parent=1 // pred_check_branch
      %87 = sbr.rel target = $region17
    $region16: #{tpu_custom_call.1} parent=1 // pred_region
      %88 = sst [smem:[#allocation9]] [#allocation16]
      %89 = sst [smem:[#allocation10]] [#allocation15]
    $region17: #{tpu_custom_call.1} parent=1 // pred_fallthru
      _
    %91 = shalt.err (0)
    %s93 = sshll.u32 %s84, 4
    %s94 = int_to_ptr.hbm [resolvable:$true] %s93
    %s95 = sshll.u32 %s85, 4
    %s96 = int_to_ptr.vmem [resolvable:$true] %s95
    %98 = dma.hbm_to_vmem [thread:$0]  %s94, 16, %s96, [#allocation2]
    %s99 = sadd.s32 %s16, 4
    %s100 = sld [smem:[#allocation4 + %s99]]
    %p101 = scmp.gt.s32.totalorder %s100, 0
    %s102 = scalar_select %p101, %s100, 0
    %p103 = scmp.lt.s32.totalorder %s102, 31
    %s104 = scalar_select %p103, %s102, 31
    %s105 = scalar_lea.hbm %s1, %s104
    %s106 = scalar_lea.vmem [#allocation5], 4
    // Predicated region
    $region18: #{tpu_custom_call.1} parent=1 // pred_check
      _
    $region19: #{tpu_custom_call.1} parent=1 // pred_check_branch
      %108 = sbr.rel target = $region21
    $region20: #{tpu_custom_call.1} parent=1 // pred_region
      %109 = sst [smem:[#allocation9]] [#allocation18]
      %110 = sst [smem:[#allocation10]] [#allocation17]
    $region21: #{tpu_custom_call.1} parent=1 // pred_fallthru
      _
    %112 = shalt.err (0)
    %s114 = sshll.u32 %s105, 4
    %s115 = int_to_ptr.hbm [resolvable:$true] %s114
    %s116 = sshll.u32 %s106, 4
    %s117 = int_to_ptr.vmem [resolvable:$true] %s116
    %119 = dma.hbm_to_vmem [thread:$0]  %s115, 16, %s117, [#allocation2]
    %s120 = sadd.s32 %s16, 5
    %s121 = sld [smem:[#allocation4 + %s120]]
    %p122 = scmp.gt.s32.totalorder %s121, 0
    %s123 = scalar_select %p122, %s121, 0
    %p124 = scmp.lt.s32.totalorder %s123, 31
    %s125 = scalar_select %p124, %s123, 31
    %s126 = scalar_lea.hbm %s1, %s125
    %s127 = scalar_lea.vmem [#allocation5], 5
    // Predicated region
    $region22: #{tpu_custom_call.1} parent=1 // pred_check
      _
    $region23: #{tpu_custom_call.1} parent=1 // pred_check_branch
      %129 = sbr.rel target = $region25
    $region24: #{tpu_custom_call.1} parent=1 // pred_region
      %130 = sst [smem:[#allocation9]] [#allocation20]
      %131 = sst [smem:[#allocation10]] [#allocation19]
    $region25: #{tpu_custom_call.1} parent=1 // pred_fallthru
      _
    %133 = shalt.err (0)
    %s135 = sshll.u32 %s126, 4
    %s136 = int_to_ptr.hbm [resolvable:$true] %s135
    %s137 = sshll.u32 %s127, 4
    %s138 = int_to_ptr.vmem [resolvable:$true] %s137
    %140 = dma.hbm_to_vmem [thread:$0]  %s136, 16, %s138, [#allocation2]
    %s141 = sadd.s32 %s16, 6
    %s142 = sld [smem:[#allocation4 + %s141]]
    %p143 = scmp.gt.s32.totalorder %s142, 0
    %s144 = scalar_select %p143, %s142, 0
    %p145 = scmp.lt.s32.totalorder %s144, 31
    %s146 = scalar_select %p145, %s144, 31
    %s147 = scalar_lea.hbm %s1, %s146
    %s148 = scalar_lea.vmem [#allocation5], 6
    // Predicated region
    $region26: #{tpu_custom_call.1} parent=1 // pred_check
      _
    $region27: #{tpu_custom_call.1} parent=1 // pred_check_branch
      %150 = sbr.rel target = $region29
    $region28: #{tpu_custom_call.1} parent=1 // pred_region
      %151 = sst [smem:[#allocation9]] [#allocation22]
      %152 = sst [smem:[#allocation10]] [#allocation21]
    $region29: #{tpu_custom_call.1} parent=1 // pred_fallthru
      _
    %154 = shalt.err (0)
    %s156 = sshll.u32 %s147, 4
    %s157 = int_to_ptr.hbm [resolvable:$true] %s156
    %s158 = sshll.u32 %s148, 4
    %s159 = int_to_ptr.vmem [resolvable:$true] %s158
    %161 = dma.hbm_to_vmem [thread:$0]  %s157, 16, %s159, [#allocation2]
    %s162 = sadd.s32 %s16, 7
    %s163 = sld [smem:[#allocation4 + %s162]]
    %p164 = scmp.gt.s32.totalorder %s163, 0
    %s165 = scalar_select %p164, %s163, 0
    %p166 = scmp.lt.s32.totalorder %s165, 31
    %s167 = scalar_select %p166, %s165, 31
    %s168 = scalar_lea.hbm %s1, %s167
    %s169 = scalar_lea.vmem [#allocation5], 7
    // Predicated region
    $region30: #{tpu_custom_call.1} parent=1 // pred_check
      _
    $region31: #{tpu_custom_call.1} parent=1 // pred_check_branch
      %171 = sbr.rel target = $region33
    $region32: #{tpu_custom_call.1} parent=1 // pred_region
      %172 = sst [smem:[#allocation9]] [#allocation24]
      %173 = sst [smem:[#allocation10]] [#allocation23]
    $region33: #{tpu_custom_call.1} parent=1 // pred_fallthru
      _
    %175 = shalt.err (0)
    %s177 = sshll.u32 %s168, 4
    %s178 = int_to_ptr.hbm [resolvable:$true] %s177
    %s179 = sshll.u32 %s169, 4
    %s180 = int_to_ptr.vmem [resolvable:$true] %s179
    %182 = dma.hbm_to_vmem [thread:$0]  %s178, 16, %s180, [#allocation2]
    %s183 = sadd.s32 %s16, 8
    %s184 = sld [smem:[#allocation4 + %s183]]
    %p185 = scmp.gt.s32.totalorder %s184, 0
    %s186 = scalar_select %p185, %s184, 0
    %p187 = scmp.lt.s32.totalorder %s186, 31
    %s188 = scalar_select %p187, %s186, 31
    %s189 = scalar_lea.hbm %s1, %s188
    %s190 = scalar_lea.vmem [#allocation5], 8
    // Predicated region
    $region34: #{tpu_custom_call.1} parent=1 // pred_check
      _
    $region35: #{tpu_custom_call.1} parent=1 // pred_check_branch
      %192 = sbr.rel target = $region37
    $region36: #{tpu_custom_call.1} parent=1 // pred_region
      %193 = sst [smem:[#allocation9]] [#allocation26]
      %194 = sst [smem:[#allocation10]] [#allocation25]
    $region37: #{tpu_custom_call.1} parent=1 // pred_fallthru
      _
    %196 = shalt.err (0)
    %s198 = sshll.u32 %s189, 4
    %s199 = int_to_ptr.hbm [resolvable:$true] %s198
    %s200 = sshll.u32 %s190, 4
    %s201 = int_to_ptr.vmem [resolvable:$true] %s200
    %203 = dma.hbm_to_vmem [thread:$0]  %s199, 16, %s201, [#allocation2]
    %s204 = sadd.s32 %s16, 9
    %s205 = sld [smem:[#allocation4 + %s204]]
    %p206 = scmp.gt.s32.totalorder %s205, 0
    %s207 = scalar_select %p206, %s205, 0
    %p208 = scmp.lt.s32.totalorder %s207, 31
    %s209 = scalar_select %p208, %s207, 31
    %s210 = scalar_lea.hbm %s1, %s209
    %s211 = scalar_lea.vmem [#allocation5], 9
    // Predicated region
    $region38: #{tpu_custom_call.1} parent=1 // pred_check
      _
    $region39: #{tpu_custom_call.1} parent=1 // pred_check_branch
      %213 = sbr.rel target = $region41
    $region40: #{tpu_custom_call.1} parent=1 // pred_region
      %214 = sst [smem:[#allocation9]] [#allocation28]
      %215 = sst [smem:[#allocation10]] [#allocation27]
    $region41: #{tpu_custom_call.1} parent=1 // pred_fallthru
      _
    %217 = shalt.err (0)
    %s219 = sshll.u32 %s210, 4
    %s220 = int_to_ptr.hbm [resolvable:$true] %s219
    %s221 = sshll.u32 %s211, 4
    %s222 = int_to_ptr.vmem [resolvable:$true] %s221
    %224 = dma.hbm_to_vmem [thread:$0]  %s220, 16, %s222, [#allocation2]
    %s225 = sadd.s32 %s16, 10
    %s226 = sld [smem:[#allocation4 + %s225]]
    %p227 = scmp.gt.s32.totalorder %s226, 0
    %s228 = scalar_select %p227, %s226, 0
    %p229 = scmp.lt.s32.totalorder %s228, 31
    %s230 = scalar_select %p229, %s228, 31
    %s231 = scalar_lea.hbm %s1, %s230
    %s232 = scalar_lea.vmem [#allocation5], 10
    // Predicated region
    $region42: #{tpu_custom_call.1} parent=1 // pred_check
      _
    $region43: #{tpu_custom_call.1} parent=1 // pred_check_branch
      %234 = sbr.rel target = $region45
    $region44: #{tpu_custom_call.1} parent=1 // pred_region
      %235 = sst [smem:[#allocation9]] [#allocation30]
      %236 = sst [smem:[#allocation10]] [#allocation29]
    $region45: #{tpu_custom_call.1} parent=1 // pred_fallthru
      _
    %238 = shalt.err (0)
    %s240 = sshll.u32 %s231, 4
    %s241 = int_to_ptr.hbm [resolvable:$true] %s240
    %s242 = sshll.u32 %s232, 4
    %s243 = int_to_ptr.vmem [resolvable:$true] %s242
    %245 = dma.hbm_to_vmem [thread:$0]  %s241, 16, %s243, [#allocation2]
    %s246 = sadd.s32 %s16, 11
    %s247 = sld [smem:[#allocation4 + %s246]]
    %p248 = scmp.gt.s32.totalorder %s247, 0
    %s249 = scalar_select %p248, %s247, 0
    %p250 = scmp.lt.s32.totalorder %s249, 31
    %s251 = scalar_select %p250, %s249, 31
    %s252 = scalar_lea.hbm %s1, %s251
    %s253 = scalar_lea.vmem [#allocation5], 11
    // Predicated region
    $region46: #{tpu_custom_call.1} parent=1 // pred_check
      _
    $region47: #{tpu_custom_call.1} parent=1 // pred_check_branch
      %255 = sbr.rel target = $region49
    $region48: #{tpu_custom_call.1} parent=1 // pred_region
      %256 = sst [smem:[#allocation9]] [#allocation32]
      %257 = sst [smem:[#allocation10]] [#allocation31]
    $region49: #{tpu_custom_call.1} parent=1 // pred_fallthru
      _
    %259 = shalt.err (0)
    %s261 = sshll.u32 %s252, 4
    %s262 = int_to_ptr.hbm [resolvable:$true] %s261
    %s263 = sshll.u32 %s253, 4
    %s264 = int_to_ptr.vmem [resolvable:$true] %s263
    %266 = dma.hbm_to_vmem [thread:$0]  %s262, 16, %s264, [#allocation2]
    %s267 = sadd.s32 %s16, 12
    %s268 = sld [smem:[#allocation4 + %s267]]
    %p269 = scmp.gt.s32.totalorder %s268, 0
    %s270 = scalar_select %p269, %s268, 0
    %p271 = scmp.lt.s32.totalorder %s270, 31
    %s272 = scalar_select %p271, %s270, 31
    %s273 = scalar_lea.hbm %s1, %s272
    %s274 = scalar_lea.vmem [#allocation5], 12
    // Predicated region
    $region50: #{tpu_custom_call.1} parent=1 // pred_check
      _
    $region51: #{tpu_custom_call.1} parent=1 // pred_check_branch
      %276 = sbr.rel target = $region53
    $region52: #{tpu_custom_call.1} parent=1 // pred_region
      %277 = sst [smem:[#allocation9]] [#allocation34]
      %278 = sst [smem:[#allocation10]] [#allocation33]
    $region53: #{tpu_custom_call.1} parent=1 // pred_fallthru
      _
    %280 = shalt.err (0)
    %s282 = sshll.u32 %s273, 4
    %s283 = int_to_ptr.hbm [resolvable:$true] %s282
    %s284 = sshll.u32 %s274, 4
    %s285 = int_to_ptr.vmem [resolvable:$true] %s284
    %287 = dma.hbm_to_vmem [thread:$0]  %s283, 16, %s285, [#allocation2]
    %s288 = sadd.s32 %s16, 13
    %s289 = sld [smem:[#allocation4 + %s288]]
    %p290 = scmp.gt.s32.totalorder %s289, 0
    %s291 = scalar_select %p290, %s289, 0
    %p292 = scmp.lt.s32.totalorder %s291, 31
    %s293 = scalar_select %p292, %s291, 31
    %s294 = scalar_lea.hbm %s1, %s293
    %s295 = scalar_lea.vmem [#allocation5], 13
    // Predicated region
    $region54: #{tpu_custom_call.1} parent=1 // pred_check
      _
    $region55: #{tpu_custom_call.1} parent=1 // pred_check_branch
      %297 = sbr.rel target = $region57
    $region56: #{tpu_custom_call.1} parent=1 // pred_region
      %298 = sst [smem:[#allocation9]] [#allocation36]
      %299 = sst [smem:[#allocation10]] [#allocation35]
    $region57: #{tpu_custom_call.1} parent=1 // pred_fallthru
      _
    %301 = shalt.err (0)
    %s303 = sshll.u32 %s294, 4
    %s304 = int_to_ptr.hbm [resolvable:$true] %s303
    %s305 = sshll.u32 %s295, 4
    %s306 = int_to_ptr.vmem [resolvable:$true] %s305
    %308 = dma.hbm_to_vmem [thread:$0]  %s304, 16, %s306, [#allocation2]
    %s309 = sadd.s32 %s16, 14
    %s310 = sld [smem:[#allocation4 + %s309]]
    %p311 = scmp.gt.s32.totalorder %s310, 0
    %s312 = scalar_select %p311, %s310, 0
    %p313 = scmp.lt.s32.totalorder %s312, 31
    %s314 = scalar_select %p313, %s312, 31
    %s315 = scalar_lea.hbm %s1, %s314
    %s316 = scalar_lea.vmem [#allocation5], 14
    // Predicated region
    $region58: #{tpu_custom_call.1} parent=1 // pred_check
      _
    $region59: #{tpu_custom_call.1} parent=1 // pred_check_branch
      %318 = sbr.rel target = $region61
    $region60: #{tpu_custom_call.1} parent=1 // pred_region
      %319 = sst [smem:[#allocation9]] [#allocation38]
      %320 = sst [smem:[#allocation10]] [#allocation37]
    $region61: #{tpu_custom_call.1} parent=1 // pred_fallthru
      _
    %322 = shalt.err (0)
    %s324 = sshll.u32 %s315, 4
    %s325 = int_to_ptr.hbm [resolvable:$true] %s324
    %s326 = sshll.u32 %s316, 4
    %s327 = int_to_ptr.vmem [resolvable:$true] %s326
    %329 = dma.hbm_to_vmem [thread:$0]  %s325, 16, %s327, [#allocation2]
    %s330 = sadd.s32 %s16, 15
    %s331 = sld [smem:[#allocation4 + %s330]]
    %p332 = scmp.gt.s32.totalorder %s331, 0
    %s333 = scalar_select %p332, %s331, 0
    %p334 = scmp.lt.s32.totalorder %s333, 31
    %s335 = scalar_select %p334, %s333, 31
    %s336 = scalar_lea.hbm %s1, %s335
    %s337 = scalar_lea.vmem [#allocation5], 15
    // Predicated region
    $region62: #{tpu_custom_call.1} parent=1 // pred_check
      _
    $region63: #{tpu_custom_call.1} parent=1 // pred_check_branch
      %339 = sbr.rel target = $region65
    $region64: #{tpu_custom_call.1} parent=1 // pred_region
      %340 = sst [smem:[#allocation9]] [#allocation40]
      %341 = sst [smem:[#allocation10]] [#allocation39]
    $region65: #{tpu_custom_call.1} parent=1 // pred_fallthru
      _
    %343 = shalt.err (0)
    %s345 = sshll.u32 %s336, 4
    %s346 = int_to_ptr.hbm [resolvable:$true] %s345
    %s347 = sshll.u32 %s337, 4
    %s348 = int_to_ptr.vmem [resolvable:$true] %s347
    %350 = dma.hbm_to_vmem [thread:$0]  %s346, 16, %s348, [#allocation2]
    %s351 = smul.u32 1, 1
    %s352 = sshll.u32 %s351, 4
    %353 = dma.done [#allocation2], %s352
    %s354 = sshll.u32 %s351, 4
    %355 = dma.done [#allocation2], %s354
    %s356 = sshll.u32 %s351, 4
    %357 = dma.done [#allocation2], %s356
    %s358 = sshll.u32 %s351, 4
    %359 = dma.done [#allocation2], %s358
    %s360 = sshll.u32 %s351, 4
    %361 = dma.done [#allocation2], %s360
    %s362 = sshll.u32 %s351, 4
    %363 = dma.done [#allocation2], %s362
    %s364 = sshll.u32 %s351, 4
    %365 = dma.done [#allocation2], %s364
    %s366 = sshll.u32 %s351, 4
    %367 = dma.done [#allocation2], %s366
    %s368 = sshll.u32 %s351, 4
    %369 = dma.done [#allocation2], %s368
    %s370 = sshll.u32 %s351, 4
    %371 = dma.done [#allocation2], %s370
    %s372 = sshll.u32 %s351, 4
    %373 = dma.done [#allocation2], %s372
    %s374 = sshll.u32 %s351, 4
    %375 = dma.done [#allocation2], %s374
    %s376 = sshll.u32 %s351, 4
    %377 = dma.done [#allocation2], %s376
    %s378 = sshll.u32 %s351, 4
    %379 = dma.done [#allocation2], %s378
    %s380 = sshll.u32 %s351, 4
    %381 = dma.done [#allocation2], %s380
    %s382 = sshll.u32 %s351, 4
    %383 = dma.done [#allocation2], %s382
    // Predicated region
    $region66: #{tpu_custom_call.1} parent=1 // pred_check
      _
    $region67: #{tpu_custom_call.1} parent=1 // pred_check_branch
      %385 = sbr.rel (0) target = $region69
    $region68: #{tpu_custom_call.1} parent=1 // pred_region
      %387 = vsyncadd [#allocation6], 0
      %s388 = sshll.u32 [#allocation5], 4
      %s389 = int_to_ptr.vmem [resolvable:$true] %s388
      %s390 = sshll.u32 %s2, 4
      %s391 = int_to_ptr.hbm [resolvable:$true] %s390
      %396 = dma.vmem_to_hbm [thread:$0]  %s389, 256, %s391, [#allocation6], 128, 128, 8
    $region69: #{tpu_custom_call.1} parent=1 // pred_fallthru
      _
    // Predicated region
    $region70: #{tpu_custom_call.1} parent=1 // pred_check
      _
    $region71: #{tpu_custom_call.1} parent=1 // pred_check_branch
      %398 = sbr.rel (0) target = $region73
    $region72: #{tpu_custom_call.1} parent=1 // pred_region
      %400 = dma.done [#allocation6], 256
    $region73: #{tpu_custom_call.1} parent=1 // pred_fallthru
      _
    %401 = vsyncpa [#allocation6], 1
  %402 = vsyncmov [#allocation2]
  %s403 = vpop.sfrf %402
  %p404 = scmp.eq.s32.totalorder %s403, 0
  %p405 = pneg %p404
  %407 = shalt.err (%p405)

</llo_original>
